<compile_context>
chip_gen: v5e
topology: v5e:2x2
jax: 0.10.0
libtpu: 0.0.40
codegen_flags: <defaults>
</compile_context>

<pallas_src>
import functools

import jax
import jax.numpy as jnp
from jax.experimental import pallas as pl
from jax.experimental.pallas import tpu as pltpu

_LANE = 128
_SUBLANE = 8
_MAX_TB = 512      # bigger serial tiles amortize per-grid-step overhead


def _round_up(x, m):
    return ((x + m - 1) // m) * m


def _pad_gate_cols(w, size, size_p):
    """[K, 3*size] -> [K, 3*size_p]: zero-pad every gate block to size_p cols."""
    if size_p == size:
        return w
    k = w.shape[0]
    w3 = w.reshape(k, 3, size)
    w3 = jnp.pad(w3, ((0, 0), (0, 0), (0, size_p - size)))
    return w3.reshape(k, 3 * size_p)


def prepare_gru_params(weight, gamma=None, beta=None, *, inp_size, size,
                       dtype=jnp.bfloat16):
    """One-time repack of the PyTorch parameters (do at init, not per step).

    weight : [3*size, inp_size + size]  (PyTorch nn.Linear layout, bias=False)
    gamma, beta : [3*size] LayerNorm affine params (only needed for norm=True)
    dtype  : dtype fed to the MXU (bf16 by default: full-rate MXU dtype,
             halves weight HBM/VMEM; accumulation stays f32 in-kernel).
    """
    size_p = _round_up(size, _LANE)
    inp_p = _round_up(inp_size, _LANE)

    w_t = jnp.asarray(weight, jnp.float32).T                 # [inp+size, 3*size]
    w_x = _pad_gate_cols(w_t[:inp_size], size, size_p)       # [inp,    3*size_p]
    w_x = jnp.pad(w_x, ((0, inp_p - inp_size), (0, 0)))      # K-pad -> inp_p
    w_h = _pad_gate_cols(w_t[inp_size:], size, size_p)       # [size,   3*size_p]
    w_h = jnp.pad(w_h, ((0, size_p - size), (0, 0)))         # K-pad -> size_p

    params = {"w_x": w_x.astype(dtype), "w_h": w_h.astype(dtype),
              "inp_size": int(inp_size), "inp_p": int(inp_p),
              "size": int(size), "size_p": int(size_p),
              "gamma": None, "beta": None}
    if gamma is not None:
        g = jnp.asarray(gamma, jnp.float32).reshape(3, size)
        g = jnp.pad(g, ((0, 0), (0, size_p - size))).reshape(1, 3 * size_p)
        params["gamma"] = g
    if beta is not None:
        b = jnp.asarray(beta, jnp.float32).reshape(3, size)
        b = jnp.pad(b, ((0, 0), (0, size_p - size))).reshape(1, 3 * size_p)
        params["beta"] = b
    return params


def _gru_kernel(x_ref, h_ref, wx_ref, wh_ref, *rest, size, size_p,
                update_bias, norm, eps):
    if norm:
        g_ref, b_ref, o_ref = rest
    else:
        (o_ref,) = rest

    w_dtype = wx_ref.dtype
    h = h_ref[...]                                   # carried-state dtype (f32)
    x = x_ref[...].astype(w_dtype)                   # MXU operand dtype (bf16)
    hm = h.astype(w_dtype)

    # parts = cat([x, h]) @ W  as two accumulating MXU matmuls (no concat copy),
    # bf16 operands with f32 accumulation.
    parts = jnp.dot(x, wx_ref[...], preferred_element_type=jnp.float32)
    parts = parts + jnp.dot(hm, wh_ref[...], preferred_element_type=jnp.float32)

    if norm:
        # Padded gate lanes of `parts` are exactly zero (zero-padded weight
        # columns), so the mean over all lanes equals the mean over the true
        # 3*size lanes, and the padded lanes contribute exactly
        # 3*(size_p-size) * mean^2 to sum(centered^2) -> subtract in closed form
        # instead of building / applying a lane mask.
        inv_n = 1.0 / (3.0 * size)
        pad_frac = float(size_p - size) / float(size)
        mean = jnp.sum(parts, axis=-1, keepdims=True) * inv_n
        centered = parts - mean
        var = (jnp.sum(centered * centered, axis=-1, keepdims=True) * inv_n
               - pad_frac * (mean * mean))
        parts = centered * jax.lax.rsqrt(var + eps)
        parts = parts * g_ref[...] + b_ref[...]

    # Lane-aligned gate slices (size_p is a multiple of 128).
    reset = parts[:, 0 * size_p:1 * size_p]
    cand = parts[:, 1 * size_p:2 * size_p]
    update = parts[:, 2 * size_p:3 * size_p]

    reset = jax.nn.sigmoid(reset)
    cand = jnp.tanh(reset * cand)
    update = jax.nn.sigmoid(update + update_bias)

    h32 = h.astype(jnp.float32)
    out = h32 + update * (cand - h32)       # == update*cand + (1-update)*h
    if size_p != size:
        # Keep the padded carry columns at exactly zero across steps.
        lane = jax.lax.broadcasted_iota(jnp.int32, (1, size_p), 1)
        out = jnp.where(lane < size, out, 0.0)
    o_ref[...] = out.astype(o_ref.dtype)


def _vmem_limit_bytes(tb, inp_p, size_p, params, x_dtype, h_dtype, norm):
    w_item = jnp.dtype(params["w_x"].dtype).itemsize
    x_item = jnp.dtype(x_dtype).itemsize
    h_item = jnp.dtype(h_dtype).itemsize
    need = (inp_p + size_p) * 3 * size_p * w_item        # weights, Buffered(1)
    need += 2 * tb * inp_p * x_item                      # x tiles (double buf)
    need += 2 * tb * size_p * h_item                     # h tiles
    need += 2 * tb * size_p * h_item                     # out tiles
    if norm:
        need += 2 * 2 * 3 * size_p * 4                   # gamma / beta
    need += 4 * tb * 3 * size_p * 4                      # f32 parts / temps
    need += 4 << 20                                      # slack
    try:
        cap = int(pltpu.get_tpu_info().vmem_capacity_bytes) - (8 << 20)
    except Exception:
        cap = 56 << 20                                   # safe on v7x's 64 MiB
    return int(min(max(need, 32 << 20), cap))


def gru_cell_forward_padded(x_p, h_p, params, *, update_bias=-1.0, norm=False,
                            eps=1e-3):
    """Pad-free GRU step on already-padded operands.

    x_p : [b_pad, inp_p]   (b_pad multiple of 8, inp_p = params['inp_p'])
    h_p : [b_pad, size_p]  (padded carried state; pad columns zero)
    Returns the padded new state [b_pad, size_p].
    Use this directly in rollouts: pad once on entry, slice once on exit.
    """
    b_pad, inp_p = x_p.shape
    size, size_p = params["size"], params["size_p"]
    assert inp_p == params["inp_p"]
    assert h_p.shape == (b_pad, size_p)
    assert b_pad % _SUBLANE == 0

    if b_pad <= _MAX_TB:
        tb = b_pad
    else:
        tb = _MAX_TB
        assert b_pad % tb == 0, "pad the batch to a multiple of 512 rows"
    grid = (b_pad // tb,)
    # Only shard across TensorCores when there is enough batch work; otherwise
    # each core would DMA its own full copy of the resident weights (v7x).
    semantics = ("parallel",) if grid[0] >= 8 else ("arbitrary",)

    args = [x_p, h_p, params["w_x"], params["w_h"]]
    in_specs = [
        pl.BlockSpec((tb, inp_p), lambda i: (i, 0)),
        pl.BlockSpec((tb, size_p), lambda i: (i, 0)),
        # Constant block index + single buffer: weights stay resident in VMEM.
        pl.BlockSpec((inp_p, 3 * size_p), lambda i: (0, 0),
                     pipeline_mode=pl.Buffered(1)),
        pl.BlockSpec((size_p, 3 * size_p), lambda i: (0, 0),
                     pipeline_mode=pl.Buffered(1)),
    ]
    if norm:
        assert params["gamma"] is not None and params["beta"] is not None
        args += [params["gamma"], params["beta"]]
        in_specs += [
            pl.BlockSpec((1, 3 * size_p), lambda i: (0, 0),
                         pipeline_mode=pl.Buffered(1)),
            pl.BlockSpec((1, 3 * size_p), lambda i: (0, 0),
                         pipeline_mode=pl.Buffered(1)),
        ]

    kernel = functools.partial(
        _gru_kernel, size=size, size_p=size_p,
        update_bias=float(update_bias), norm=bool(norm), eps=float(eps))

    vmem_limit = _vmem_limit_bytes(tb, inp_p, size_p, params,
                                   x_p.dtype, h_p.dtype, norm)

    return pl.pallas_call(
        kernel,
        grid=grid,
        out_shape=jax.ShapeDtypeStruct((b_pad, size_p), h_p.dtype),
        in_specs=in_specs,
        out_specs=pl.BlockSpec((tb, size_p), lambda i: (i, 0)),
        # New padded state may reuse the old padded-state buffer when donated.
        input_output_aliases={1: 0},
        compiler_params=pltpu.CompilerParams(
            dimension_semantics=semantics,
            vmem_limit_bytes=vmem_limit,
        ),
    )(*args)


def gru_cell_forward(inputs, state, params, *, update_bias=-1.0, norm=False,
                     eps=1e-3):
    """API-compatible Pallas GRUCell forward step.

    inputs : [B, inp_size]
    state  : list/tuple whose first element is [B, size]  (matches PyTorch API)
    params : output of prepare_gru_params
    Returns (output, [output]) with output: [B, size].

    For multi-step rollouts prefer gru_cell_forward_padded and keep the carry
    in the padded layout (this wrapper pads/slices every step).
    """
    h = state[0]
    B, inp_size = inputs.shape
    size, size_p, inp_p = params["size"], params["size_p"], params["inp_p"]
    assert inp_size == params["inp_size"]

    b_pad = _round_up(B, _SUBLANE)
    if b_pad > _MAX_TB:
        b_pad = _round_up(b_pad, _MAX_TB)

    x_p = jnp.pad(inputs, ((0, b_pad - B), (0, inp_p - inp_size)))
    h_p = jnp.pad(h, ((0, b_pad - B), (0, size_p - size)))   # keep state dtype

    out_p = gru_cell_forward_padded(x_p, h_p, params, update_bias=update_bias,
                                    norm=norm, eps=eps)
    out = out_p[:B, :size]
    return out, [out]


def _reference(inputs, state, weight, gamma, beta, *, size, update_bias=-1.0,
               norm=False, eps=1e-3, matmul_dtype=jnp.float32):
    """Pure-JAX reference. matmul_dtype=bf16 rounds the matmul operands the
    same way the kernel does (weights stored bf16, operands cast to bf16)."""
    h = state[0]
    xh = jnp.concatenate([inputs, h], axis=-1)
    xh = xh.astype(matmul_dtype).astype(jnp.float32)
    w = jnp.asarray(weight).astype(matmul_dtype).astype(jnp.float32)
    parts = xh @ w.T
    if norm:
        mean = jnp.mean(parts, -1, keepdims=True)
        var = jnp.mean(jnp.square(parts - mean), -1, keepdims=True)
        parts = (parts - mean) * jax.lax.rsqrt(var + eps) * gamma + beta
    reset, cand, update = jnp.split(parts, 3, axis=-1)
    reset = jax.nn.sigmoid(reset)
    cand = jnp.tanh(reset * cand)
    update = jax.nn.sigmoid(update + update_bias)
    return update * cand + (1.0 - update) * h


if __name__ == "__main__":
    # Small shapes consistent with the module's forward.
    B, INP, SIZE = 8, 32, 32
    key = jax.random.PRNGKey(0)
    k_x, k_h, k_w, k_g, k_b = jax.random.split(key, 5)

    inputs = jax.random.normal(k_x, (B, INP), dtype=jnp.float32)
    h0 = jax.random.normal(k_h, (B, SIZE), dtype=jnp.float32)
    weight = jax.random.normal(k_w, (3 * SIZE, INP + SIZE), dtype=jnp.float32) * 0.05
    gamma = 1.0 + 0.1 * jax.random.normal(k_g, (3 * SIZE,), dtype=jnp.float32)
    beta = 0.1 * jax.random.normal(k_b, (3 * SIZE,), dtype=jnp.float32)

    # One-time parameter repack (pre-transposed, gate/K-padded, bf16 MXU dtype).
    params = prepare_gru_params(weight, gamma, beta, inp_size=INP, size=SIZE,
                                dtype=jnp.bfloat16)

    # References use the same bf16 rounding of the matmul operands as the
    # kernel; remaining differences are f32 accumulation-order only.
    ref_plain = _reference(inputs, [h0], weight, gamma, beta, size=SIZE,
                           update_bias=-1.0, norm=False, eps=1e-3,
                           matmul_dtype=jnp.bfloat16)
    ref_norm = _reference(inputs, [h0], weight, gamma, beta, size=SIZE,
                          update_bias=-1.0, norm=True, eps=1e-3,
                          matmul_dtype=jnp.bfloat16)
    ref_plain, ref_norm = jax.block_until_ready((ref_plain, ref_norm))

    # norm=False path.
    out, new_state = gru_cell_forward(inputs, [h0], params,
                                      update_bias=-1.0, norm=False)
    out = jax.block_until_ready(out)
    assert out.shape == (B, SIZE)
    assert jnp.allclose(out, ref_plain, atol=2e-3, rtol=2e-3), \
        float(jnp.max(jnp.abs(out - ref_plain)))
    assert jnp.allclose(new_state[0], out)

    # norm=True path (exercises the padded-lane LayerNorm correction).
    out_n, _ = gru_cell_forward(inputs, [h0], params,
                                update_bias=-1.0, norm=True)
    out_n = jax.block_until_ready(out_n)
    assert out_n.shape == (B, SIZE)
    assert jnp.allclose(out_n, ref_norm, atol=2e-3, rtol=2e-3), \
        float(jnp.max(jnp.abs(out_n - ref_norm)))

    # Padded-carry step (what a rollout would use): pad once, step, no slicing.
    x_p = jnp.pad(inputs, ((0, 0), (0, params["inp_p"] - INP)))
    h_p = jnp.pad(h0, ((0, 0), (0, params["size_p"] - SIZE)))
    out_p = jax.block_until_ready(
        gru_cell_forward_padded(x_p, h_p, params, update_bias=-1.0, norm=False))
    assert jnp.allclose(out_p[:B, :SIZE], ref_plain, atol=2e-3, rtol=2e-3)

    print("KERNEL_OK")
</pallas_src>

<mosaic_0001>
module attributes {stable_mosaic.version = 11 : i64} {
  func.func @_gru_kernel(%arg0: i32, %arg1: memref<8x128xf32, #tpu.memory_space<vmem>>, %arg2: memref<8x128xf32, #tpu.memory_space<vmem>>, %arg3: memref<128x384xbf16, #tpu.memory_space<vmem>>, %arg4: memref<128x384xbf16, #tpu.memory_space<vmem>>, %arg5: memref<8x128xf32, #tpu.memory_space<vmem>>) attributes {dimension_semantics = [#tpu.dimension_semantics<arbitrary>], iteration_bounds = array<i64: 1>, scalar_prefetch = 0 : i64, scratch_operands = 0 : i64, tpu.core_type = #tpu.core_type<tc>, window_params = [{transform_indices = @transform_0, window_bounds = array<i64: 8, 128>}, {transform_indices = @transform_1, window_bounds = array<i64: 8, 128>}, {pipeline_mode = #tpu.pipeline_mode<synchronous>, transform_indices = @transform_2, window_bounds = array<i64: 128, 384>}, {pipeline_mode = #tpu.pipeline_mode<synchronous>, transform_indices = @transform_3, window_bounds = array<i64: 128, 384>}, {transform_indices = @transform_4, window_bounds = array<i64: 8, 128>}]} {
    %c0 = arith.constant 0 : index
    %c0_0 = arith.constant 0 : index
    %0 = vector.load %arg2[%c0, %c0_0] : memref<8x128xf32, #tpu.memory_space<vmem>>, vector<8x128xf32>
    %c0_1 = arith.constant 0 : index
    %c0_2 = arith.constant 0 : index
    %1 = vector.load %arg1[%c0_1, %c0_2] : memref<8x128xf32, #tpu.memory_space<vmem>>, vector<8x128xf32>
    %2 = arith.truncf %1 : vector<8x128xf32> to vector<8x128xbf16>
    %3 = arith.truncf %0 : vector<8x128xf32> to vector<8x128xbf16>
    %c0_3 = arith.constant 0 : index
    %c0_4 = arith.constant 0 : index
    %4 = vector.load %arg3[%c0_3, %c0_4] : memref<128x384xbf16, #tpu.memory_space<vmem>>, vector<128x384xbf16>
    %cst = arith.constant dense<0.000000e+00> : vector<8x384xf32>
    %5 = tpu.matmul %2, %4, %cst {dimension_numbers = #tpu.dot_dimension_numbers<[1], [0], [0], [1], [0, 0, 1, 1], [], []>} : vector<8x128xbf16>, vector<128x384xbf16>, vector<8x384xf32> -> vector<8x384xf32>
    %c0_5 = arith.constant 0 : index
    %c0_6 = arith.constant 0 : index
    %6 = vector.load %arg4[%c0_5, %c0_6] : memref<128x384xbf16, #tpu.memory_space<vmem>>, vector<128x384xbf16>
    %cst_7 = arith.constant dense<0.000000e+00> : vector<8x384xf32>
    %7 = tpu.matmul %3, %6, %cst_7 {dimension_numbers = #tpu.dot_dimension_numbers<[1], [0], [0], [1], [0, 0, 1, 1], [], []>} : vector<8x128xbf16>, vector<128x384xbf16>, vector<8x384xf32> -> vector<8x384xf32>
    %8 = arith.addf %5, %7 : vector<8x384xf32>
    %9 = vector.extract_strided_slice %8 {offsets = [0, 0], sizes = [8, 128], strides = [1, 1]} : vector<8x384xf32> to vector<8x128xf32>
    %10 = vector.extract_strided_slice %8 {offsets = [0, 128], sizes = [8, 128], strides = [1, 1]} : vector<8x384xf32> to vector<8x128xf32>
    %11 = vector.extract_strided_slice %8 {offsets = [0, 256], sizes = [8, 128], strides = [1, 1]} : vector<8x384xf32> to vector<8x128xf32>
    %12 = arith.negf %9 : vector<8x128xf32>
    %13 = math.exp %12 : vector<8x128xf32>
    %cst_8 = arith.constant 1.000000e+00 : f32
    %14 = vector.broadcast %cst_8 : f32 to vector<8x128xf32>
    %15 = arith.addf %14, %13 : vector<8x128xf32>
    %16 = arith.divf %14, %15 : vector<8x128xf32>
    %17 = arith.mulf %16, %10 : vector<8x128xf32>
    %18 = math.tanh %17 : vector<8x128xf32>
    %cst_9 = arith.constant -1.000000e+00 : f32
    %19 = vector.broadcast %cst_9 : f32 to vector<8x128xf32>
    %20 = arith.addf %11, %19 : vector<8x128xf32>
    %21 = arith.negf %20 : vector<8x128xf32>
    %22 = math.exp %21 : vector<8x128xf32>
    %cst_10 = arith.constant 1.000000e+00 : f32
    %23 = vector.broadcast %cst_10 : f32 to vector<8x128xf32>
    %24 = arith.addf %23, %22 : vector<8x128xf32>
    %25 = arith.divf %23, %24 : vector<8x128xf32>
    %26 = arith.subf %18, %0 : vector<8x128xf32>
    %27 = arith.mulf %25, %26 : vector<8x128xf32>
    %28 = arith.addf %0, %27 : vector<8x128xf32>
    %29 = tpu.iota {dimensions = array<i32: 1>} : vector<1x128xi32>
    %c32_i32 = arith.constant 32 : i32
    %30 = vector.broadcast %c32_i32 : i32 to vector<1x128xi32>
    %31 = arith.cmpi slt, %29, %30 : vector<1x128xi32>
    %cst_11 = arith.constant 0.000000e+00 : f32
    %32 = vector.shape_cast %31 : vector<1x128xi1> to vector<1x128xi1>
    %33 = vector.broadcast %32 : vector<1x128xi1> to vector<8x128xi1>
    %34 = vector.broadcast %cst_11 : f32 to vector<8x128xf32>
    %35 = arith.select %33, %28, %34 : vector<8x128xi1>, vector<8x128xf32>
    %c0_12 = arith.constant 0 : index
    %c0_13 = arith.constant 0 : index
    %36 = vector.load %arg5[%c0_12, %c0_13] : memref<8x128xf32, #tpu.memory_space<vmem>>, vector<8x128xf32>
    tpu.vector_store %arg5[%c0_12, %c0_13], %35 {strides = array<i32>} : memref<8x128xf32, #tpu.memory_space<vmem>>, vector<8x128xf32>,
    return
  }
  func.func @transform_0(%arg0: i32) -> (i32, i32) {
    %c0_i32 = arith.constant 0 : i32
    %c0_i32_0 = arith.constant 0 : i32
    return %arg0, %c0_i32 : i32, i32
  }
  func.func @transform_1(%arg0: i32) -> (i32, i32) {
    %c0_i32 = arith.constant 0 : i32
    %c0_i32_0 = arith.constant 0 : i32
    return %arg0, %c0_i32 : i32, i32
  }
  func.func @transform_2(%arg0: i32) -> (i32, i32) {
    %c0_i32 = arith.constant 0 : i32
    %c0_i32_0 = arith.constant 0 : i32
    %c0_i32_1 = arith.constant 0 : i32
    return %c0_i32, %c0_i32_0 : i32, i32
  }
  func.func @transform_3(%arg0: i32) -> (i32, i32) {
    %c0_i32 = arith.constant 0 : i32
    %c0_i32_0 = arith.constant 0 : i32
    %c0_i32_1 = arith.constant 0 : i32
    return %c0_i32, %c0_i32_0 : i32, i32
  }
  func.func @transform_4(%arg0: i32) -> (i32, i32) {
    %c0_i32 = arith.constant 0 : i32
    %c0_i32_0 = arith.constant 0 : i32
    return %arg0, %c0_i32 : i32, i32
  }
}

</mosaic_0001>

<llo_original>
// kernel: tpu_custom_call.1
$region0: #{tpu_custom_call.1}
  #allocation0 [shape = 'u32[]', space=smem, size = 0x4, offset = 0x4, fixed_abs, tag = 'smem constant byte address 0x4 - core index']
  #allocation1 [shape = 'u32[72,128]{1,0:T(1,128)}', space=vmem, size = 0x9000, scoped, tag = 'internal scratch']
  %s0 = inlined_call_operand.vmem [shape: f32[8,128], index: 0, kind: input, shape index: {}]
  %s1 = inlined_call_operand.hbm [shape: f32[8,128], index: 1, kind: input, shape index: {}, may-alias: {1,4}]
  %s2 = inlined_call_operand.hbm [shape: bf16[128,384], index: 2, kind: input, shape index: {}]
  %s3 = inlined_call_operand.hbm [shape: bf16[128,384], index: 3, kind: input, shape index: {}]
  %s4 = inlined_call_operand.hbm [shape: f32[8,128], index: 4, kind: output, shape index: {}, may-alias: {1,4}]
  %s5 = sld [smem:[#allocation0]]
  $region38: #{tpu_custom_call.1} parent=0
    _
  %s7 = ssub.s32 1, %s5
  %s8 = scalar_select 0, %s7, %s5
  $region1: #{tpu_custom_call.1} parent=0
    #allocation2 [shape = 'u8[4096]{0}', space=vmem, size = 0x1000, scoped, tag = 'input window, operand 1, single buffered']
    #allocation3 [shape = 's32[1]{0}', space=sflag, size = 0x4, scoped, tag = 'scoped memory for tpu_custom_call.1']
    #allocation4 [shape = 's32[1]{0}', space=sflag, size = 0x4, scoped, tag = 'scoped memory for tpu_custom_call.1']
    #allocation5 [shape = 'u8[98304]{0}', space=vmem, size = 0x18000, scoped, tag = 'input window, operand 2, single buffered']
    #allocation6 [shape = 's32[1]{0}', space=sflag, size = 0x4, scoped, tag = 'scoped memory for tpu_custom_call.1']
    #allocation7 [shape = 'u8[98304]{0}', space=vmem, size = 0x18000, scoped, tag = 'input window, operand 3, single buffered']
    #allocation8 [shape = 'u8[4096]{0}', space=vmem, size = 0x1000, scoped, tag = 'output window, operand 0, single buffered']
    %9 = vsyncpa [#allocation3], 0
    %10 = vsyncpa [#allocation6], 0
    %11 = vsyncpa [#allocation4], 0
    // Predicated region
    $region2: #{tpu_custom_call.1} parent=1 // pred_check
      _
    $region3: #{tpu_custom_call.1} parent=1 // pred_check_branch
      %13 = sbr.rel (0) target = $region5
    $region4: #{tpu_custom_call.1} parent=1 // pred_region
      _
    $region5: #{tpu_custom_call.1} parent=1 // pred_fallthru
      _
    // Predicated region
    $region6: #{tpu_custom_call.1} parent=1 // pred_check
      _
    $region7: #{tpu_custom_call.1} parent=1 // pred_check_branch
      %15 = sbr.rel (0) target = $region9
    $region8: #{tpu_custom_call.1} parent=1 // pred_region
      %17 = vsyncadd [#allocation3], 0
      %s19 = sshll.u32 %s1, 4
      %s20 = int_to_ptr.hbm [resolvable:$true] %s19
      %s21 = sshll.u32 [#allocation2], 4
      %s22 = int_to_ptr.vmem [resolvable:$true] %s21
      %24 = dma.hbm_to_vmem [thread:$0]  %s20, 128, %s22, [#allocation3]
    $region9: #{tpu_custom_call.1} parent=1 // pred_fallthru
      _
    // Predicated region
    $region10: #{tpu_custom_call.1} parent=1 // pred_check
      _
    $region11: #{tpu_custom_call.1} parent=1 // pred_check_branch
      %26 = sbr.rel (0) target = $region13
    $region12: #{tpu_custom_call.1} parent=1 // pred_region
      %28 = vsyncadd [#allocation6], 0
      %s29 = sshll.u32 %s2, 4
      %s30 = int_to_ptr.hbm [resolvable:$true] %s29
      %s31 = sshll.u32 [#allocation5], 4
      %s32 = int_to_ptr.vmem [resolvable:$true] %s31
      %37 = dma.hbm_to_vmem [thread:$0]  %s30, 3072, %s32, [#allocation6], 192, 192, 12
    $region13: #{tpu_custom_call.1} parent=1 // pred_fallthru
      _
    // Predicated region
    $region14: #{tpu_custom_call.1} parent=1 // pred_check
      _
    $region15: #{tpu_custom_call.1} parent=1 // pred_check_branch
      %39 = sbr.rel (0) target = $region17
    $region16: #{tpu_custom_call.1} parent=1 // pred_region
      %41 = vsyncadd [#allocation6], 0
      %s42 = sshll.u32 %s3, 4
      %s43 = int_to_ptr.hbm [resolvable:$true] %s42
      %s44 = sshll.u32 [#allocation7], 4
      %s45 = int_to_ptr.vmem [resolvable:$true] %s44
      %50 = dma.hbm_to_vmem [thread:$0]  %s43, 3072, %s45, [#allocation6], 192, 192, 12
    $region17: #{tpu_custom_call.1} parent=1 // pred_fallthru
      _
    // Predicated region
    $region18: #{tpu_custom_call.1} parent=1 // pred_check
      _
    $region19: #{tpu_custom_call.1} parent=1 // pred_check_branch
      %52 = sbr.rel (0) target = $region21
    $region20: #{tpu_custom_call.1} parent=1 // pred_region
      %54 = dma.done [#allocation3], 128
    $region21: #{tpu_custom_call.1} parent=1 // pred_fallthru
      _
    // Predicated region
    $region22: #{tpu_custom_call.1} parent=1 // pred_check
      _
    $region23: #{tpu_custom_call.1} parent=1 // pred_check_branch
      %56 = sbr.rel (0) target = $region25
    $region24: #{tpu_custom_call.1} parent=1 // pred_region
      %58 = dma.done [#allocation6], 3072
    $region25: #{tpu_custom_call.1} parent=1 // pred_fallthru
      _
    // Predicated region
    $region26: #{tpu_custom_call.1} parent=1 // pred_check
      _
    $region27: #{tpu_custom_call.1} parent=1 // pred_check_branch
      %60 = sbr.rel (0) target = $region29
    $region28: #{tpu_custom_call.1} parent=1 // pred_region
      %62 = dma.done [#allocation6], 3072
    $region29: #{tpu_custom_call.1} parent=1 // pred_fallthru
      _
    %v63 = vld [vmem:[#allocation2] sm:$0xff]
    %v64 = vld [vmem:[%s0] sm:$0xff]
    %v65 = vpack.c.bf16 %v64, %v64
    %v66 = vpack.c.bf16 %v63, %v63
    %v67 = vld [vmem:[#allocation5] sm:$0xff]
    %v68 = vld [vmem:[#allocation5 + $0x8] sm:$0xf]
    %v69 = vld [vmem:[#allocation5 + $0xc] sm:$0xff]
    %v70 = vld [vmem:[#allocation5 + $0x14] sm:$0xf]
    %v71 = vld [vmem:[#allocation5 + $0x18] sm:$0xff]
    %v72 = vld [vmem:[#allocation5 + $0x20] sm:$0xf]
    %v73 = vld [vmem:[#allocation5 + $0x24] sm:$0xff]
    %v74 = vld [vmem:[#allocation5 + $0x2c] sm:$0xf]
    %v75 = vld [vmem:[#allocation5 + $0x30] sm:$0xff]
    %v76 = vld [vmem:[#allocation5 + $0x38] sm:$0xf]
    %v77 = vld [vmem:[#allocation5 + $0x3c] sm:$0xff]
    %v78 = vld [vmem:[#allocation5 + $0x44] sm:$0xf]
    %v79 = vld [vmem:[#allocation5 + $0x48] sm:$0xff]
    %v80 = vld [vmem:[#allocation5 + $0x50] sm:$0xf]
    %v81 = vld [vmem:[#allocation5 + $0x54] sm:$0xff]
    %v82 = vld [vmem:[#allocation5 + $0x5c] sm:$0xf]
    %v83 = vld [vmem:[#allocation5 + $0x60] sm:$0xff]
    %v84 = vld [vmem:[#allocation5 + $0x68] sm:$0xf]
    %v85 = vld [vmem:[#allocation5 + $0x6c] sm:$0xff]
    %v86 = vld [vmem:[#allocation5 + $0x74] sm:$0xf]
    %v87 = vld [vmem:[#allocation5 + $0x78] sm:$0xff]
    %v88 = vld [vmem:[#allocation5 + $0x80] sm:$0xf]
    %v89 = vld [vmem:[#allocation5 + $0x84] sm:$0xff]
    %v90 = vld [vmem:[#allocation5 + $0x8c] sm:$0xf]
    %v91 = vld [vmem:[#allocation5 + $0x90] sm:$0xff]
    %v92 = vld [vmem:[#allocation5 + $0x98] sm:$0xf]
    %v93 = vld [vmem:[#allocation5 + $0x9c] sm:$0xff]
    %v94 = vld [vmem:[#allocation5 + $0xa4] sm:$0xf]
    %v95 = vld [vmem:[#allocation5 + $0xa8] sm:$0xff]
    %v96 = vld [vmem:[#allocation5 + $0xb0] sm:$0xf]
    %v97 = vld [vmem:[#allocation5 + $0xb4] sm:$0xff]
    %v98 = vld [vmem:[#allocation5 + $0xbc] sm:$0xf]
    %v99 = vld [vmem:[#allocation7] sm:$0xff]
    %v100 = vld [vmem:[#allocation7 + $0x8] sm:$0xf]
    %v101 = vld [vmem:[#allocation7 + $0xc] sm:$0xff]
    %v102 = vld [vmem:[#allocation7 + $0x14] sm:$0xf]
    %v103 = vld [vmem:[#allocation7 + $0x18] sm:$0xff]
    %v104 = vld [vmem:[#allocation7 + $0x20] sm:$0xf]
    %v105 = vld [vmem:[#allocation7 + $0x24] sm:$0xff]
    %v106 = vld [vmem:[#allocation7 + $0x2c] sm:$0xf]
    %v107 = vld [vmem:[#allocation7 + $0x30] sm:$0xff]
    %v108 = vld [vmem:[#allocation7 + $0x38] sm:$0xf]
    %v109 = vld [vmem:[#allocation7 + $0x3c] sm:$0xff]
    %v110 = vld [vmem:[#allocation7 + $0x44] sm:$0xf]
    %v111 = vld [vmem:[#allocation7 + $0x48] sm:$0xff]
    %v112 = vld [vmem:[#allocation7 + $0x50] sm:$0xf]
    %v113 = vld [vmem:[#allocation7 + $0x54] sm:$0xff]
    %v114 = vld [vmem:[#allocation7 + $0x5c] sm:$0xf]
    %v115 = vld [vmem:[#allocation7 + $0x60] sm:$0xff]
    %v116 = vld [vmem:[#allocation7 + $0x68] sm:$0xf]
    %v117 = vld [vmem:[#allocation7 + $0x6c] sm:$0xff]
    %v118 = vld [vmem:[#allocation7 + $0x74] sm:$0xf]
    %v119 = vld [vmem:[#allocation7 + $0x78] sm:$0xff]
    %v120 = vld [vmem:[#allocation7 + $0x80] sm:$0xf]
    %v121 = vld [vmem:[#allocation7 + $0x84] sm:$0xff]
    %v122 = vld [vmem:[#allocation7 + $0x8c] sm:$0xf]
    %v123 = vld [vmem:[#allocation7 + $0x90] sm:$0xff]
    %v124 = vld [vmem:[#allocation7 + $0x98] sm:$0xf]
    %v125 = vld [vmem:[#allocation7 + $0x9c] sm:$0xff]
    %v126 = vld [vmem:[#allocation7 + $0xa4] sm:$0xf]
    %v127 = vld [vmem:[#allocation7 + $0xa8] sm:$0xff]
    %v128 = vld [vmem:[#allocation7 + $0xb0] sm:$0xf]
    %v129 = vld [vmem:[#allocation7 + $0xb4] sm:$0xff]
    %v130 = vld [vmem:[#allocation7 + $0xbc] sm:$0xf]
    %v163 = vunpack.c.l.b16 %v99
    %v164 = vunpack.c.h.b16 %v99
    %v165 = vunpack.c.l.b16 %v100
    %v166 = vunpack.c.l.b16 %v101
    %v167 = vunpack.c.h.b16 %v101
    %v168 = vunpack.c.l.b16 %v102
    %v169 = vunpack.c.l.b16 %v103
    %v170 = vunpack.c.h.b16 %v103
    %v171 = vunpack.c.l.b16 %v104
    %v172 = vunpack.c.l.b16 %v105
    %v173 = vunpack.c.h.b16 %v105
    %v174 = vunpack.c.l.b16 %v106
    %v175 = vunpack.c.l.b16 %v107
    %v176 = vunpack.c.h.b16 %v107
    %v177 = vunpack.c.l.b16 %v108
    %v178 = vunpack.c.l.b16 %v109
    %v179 = vunpack.c.h.b16 %v109
    %v180 = vunpack.c.l.b16 %v110
    %v181 = vunpack.c.l.b16 %v111
    %v182 = vunpack.c.h.b16 %v111
    %v183 = vunpack.c.l.b16 %v112
    %v184 = vunpack.c.l.b16 %v113
    %v185 = vunpack.c.h.b16 %v113
    %v186 = vunpack.c.l.b16 %v114
    %v187 = vunpack.c.l.b16 %v115
    %v188 = vunpack.c.h.b16 %v115
    %v189 = vunpack.c.l.b16 %v116
    %v190 = vunpack.c.l.b16 %v117
    %v191 = vunpack.c.h.b16 %v117
    %v192 = vunpack.c.l.b16 %v118
    %v193 = vunpack.c.l.b16 %v119
    %v194 = vunpack.c.h.b16 %v119
    %v195 = vunpack.c.l.b16 %v120
    %v196 = vunpack.c.l.b16 %v121
    %v197 = vunpack.c.h.b16 %v121
    %v198 = vunpack.c.l.b16 %v122
    %v199 = vunpack.c.l.b16 %v123
    %v200 = vunpack.c.h.b16 %v123
    %v201 = vunpack.c.l.b16 %v124
    %v202 = vunpack.c.l.b16 %v125
    %v203 = vunpack.c.h.b16 %v125
    %v204 = vunpack.c.l.b16 %v126
    %v205 = vunpack.c.l.b16 %v127
    %v206 = vunpack.c.h.b16 %v127
    %v207 = vunpack.c.l.b16 %v128
    %v208 = vunpack.c.l.b16 %v129
    %v209 = vunpack.c.h.b16 %v129
    %v210 = vunpack.c.l.b16 %v130
    %v211 = vpack.c.b16 %v166, %v163
    %v212 = vpack.c.b16 %v167, %v164
    %v213 = vpack.c.b16 %v168, %v165
    %v214 = vpack.c.b16 %v172, %v169
    %v215 = vpack.c.b16 %v173, %v170
    %v216 = vpack.c.b16 %v174, %v171
    %v217 = vpack.c.b16 %v178, %v175
    %v218 = vpack.c.b16 %v179, %v176
    %v219 = vpack.c.b16 %v180, %v177
    %v220 = vpack.c.b16 %v184, %v181
    %v221 = vpack.c.b16 %v185, %v182
    %v222 = vpack.c.b16 %v186, %v183
    %v223 = vpack.c.b16 %v190, %v187
    %v224 = vpack.c.b16 %v191, %v188
    %v225 = vpack.c.b16 %v192, %v189
    %v226 = vpack.c.b16 %v196, %v193
    %v227 = vpack.c.b16 %v197, %v194
    %v228 = vpack.c.b16 %v198, %v195
    %v229 = vpack.c.b16 %v202, %v199
    %v230 = vpack.c.b16 %v203, %v200
    %v231 = vpack.c.b16 %v204, %v201
    %v232 = vpack.c.b16 %v208, %v205
    %v233 = vpack.c.b16 %v209, %v206
    %v234 = vpack.c.b16 %v210, %v207
    %259 = vmatpush.bf16.msra.mxu0 %v232
    %260 = vmatpush.bf16.msra.mxu0 %v229
    %261 = vmatpush.bf16.msra.mxu0 %v226
    %262 = vmatpush.bf16.msra.mxu0 %v223
    %263 = vmatpush.bf16.msra.mxu0 %v220
    %264 = vmatpush.bf16.msra.mxu0 %v217
    %265 = vmatpush.bf16.msra.mxu0 %v214
    %266 = vmatpush.bf16.msra.mxu0 %v211
    %267 = vmatmul.bf16.gmra.mxu0 %v66
    %v268 = vpop.f32.mrf.mxu0
    %v269 = vadd.f32 0.0, %v268
    %v270 = vpop.f32.mrf.mxu0
    %271 = vdwg.mxu0
    %272 = vmatpush.bf16.msra.mxu0 %v233
    %273 = vmatpush.bf16.msra.mxu0 %v230
    %274 = vmatpush.bf16.msra.mxu0 %v227
    %275 = vmatpush.bf16.msra.mxu0 %v224
    %276 = vmatpush.bf16.msra.mxu0 %v221
    %277 = vmatpush.bf16.msra.mxu0 %v218
    %278 = vmatpush.bf16.msra.mxu0 %v215
    %279 = vmatpush.bf16.msra.mxu0 %v212
    %280 = vmatmul.bf16.gmra.mxu0 %v66
    %v281 = vpop.f32.mrf.mxu0
    %v282 = vadd.f32 0.0, %v281
    %v283 = vpop.f32.mrf.mxu0
    %284 = vdwg.mxu0
    %285 = vmatpush.bf16.msra.mxu0 %v234
    %286 = vmatpush.bf16.msra.mxu0 %v231
    %287 = vmatpush.bf16.msra.mxu0 %v228
    %288 = vmatpush.bf16.msra.mxu0 %v225
    %289 = vmatpush.bf16.msra.mxu0 %v222
    %290 = vmatpush.bf16.msra.mxu0 %v219
    %291 = vmatpush.bf16.msra.mxu0 %v216
    %292 = vmatpush.bf16.msra.mxu0 %v213
    %293 = vmatmul.bf16.gmra.mxu0 %v66
    %v294 = vpop.f32.mrf.mxu0
    %v295 = vadd.f32 0.0, %v294
    %v296 = vpop.f32.mrf.mxu0
    %297 = vdwg.mxu0
    %v330 = vunpack.c.l.b16 %v67
    %v331 = vunpack.c.h.b16 %v67
    %v332 = vunpack.c.l.b16 %v68
    %v333 = vunpack.c.l.b16 %v69
    %v334 = vunpack.c.h.b16 %v69
    %v335 = vunpack.c.l.b16 %v70
    %v336 = vunpack.c.l.b16 %v71
    %v337 = vunpack.c.h.b16 %v71
    %v338 = vunpack.c.l.b16 %v72
    %v339 = vunpack.c.l.b16 %v73
    %v340 = vunpack.c.h.b16 %v73
    %v341 = vunpack.c.l.b16 %v74
    %v342 = vunpack.c.l.b16 %v75
    %v343 = vunpack.c.h.b16 %v75
    %v344 = vunpack.c.l.b16 %v76
    %v345 = vunpack.c.l.b16 %v77
    %v346 = vunpack.c.h.b16 %v77
    %v347 = vunpack.c.l.b16 %v78
    %v348 = vunpack.c.l.b16 %v79
    %v349 = vunpack.c.h.b16 %v79
    %v350 = vunpack.c.l.b16 %v80
    %v351 = vunpack.c.l.b16 %v81
    %v352 = vunpack.c.h.b16 %v81
    %v353 = vunpack.c.l.b16 %v82
    %v354 = vunpack.c.l.b16 %v83
    %v355 = vunpack.c.h.b16 %v83
    %v356 = vunpack.c.l.b16 %v84
    %v357 = vunpack.c.l.b16 %v85
    %v358 = vunpack.c.h.b16 %v85
    %v359 = vunpack.c.l.b16 %v86
    %v360 = vunpack.c.l.b16 %v87
    %v361 = vunpack.c.h.b16 %v87
    %v362 = vunpack.c.l.b16 %v88
    %v363 = vunpack.c.l.b16 %v89
    %v364 = vunpack.c.h.b16 %v89
    %v365 = vunpack.c.l.b16 %v90
    %v366 = vunpack.c.l.b16 %v91
    %v367 = vunpack.c.h.b16 %v91
    %v368 = vunpack.c.l.b16 %v92
    %v369 = vunpack.c.l.b16 %v93
    %v370 = vunpack.c.h.b16 %v93
    %v371 = vunpack.c.l.b16 %v94
    %v372 = vunpack.c.l.b16 %v95
    %v373 = vunpack.c.h.b16 %v95
    %v374 = vunpack.c.l.b16 %v96
    %v375 = vunpack.c.l.b16 %v97
    %v376 = vunpack.c.h.b16 %v97
    %v377 = vunpack.c.l.b16 %v98
    %v378 = vpack.c.b16 %v333, %v330
    %v379 = vpack.c.b16 %v334, %v331
    %v380 = vpack.c.b16 %v335, %v332
    %v381 = vpack.c.b16 %v339, %v336
    %v382 = vpack.c.b16 %v340, %v337
    %v383 = vpack.c.b16 %v341, %v338
    %v384 = vpack.c.b16 %v345, %v342
    %v385 = vpack.c.b16 %v346, %v343
    %v386 = vpack.c.b16 %v347, %v344
    %v387 = vpack.c.b16 %v351, %v348
    %v388 = vpack.c.b16 %v352, %v349
    %v389 = vpack.c.b16 %v353, %v350
    %v390 = vpack.c.b16 %v357, %v354
    %v391 = vpack.c.b16 %v358, %v355
    %v392 = vpack.c.b16 %v359, %v356
    %v393 = vpack.c.b16 %v363, %v360
    %v394 = vpack.c.b16 %v364, %v361
    %v395 = vpack.c.b16 %v365, %v362
    %v396 = vpack.c.b16 %v369, %v366
    %v397 = vpack.c.b16 %v370, %v367
    %v398 = vpack.c.b16 %v371, %v368
    %v399 = vpack.c.b16 %v375, %v372
    %v400 = vpack.c.b16 %v376, %v373
    %v401 = vpack.c.b16 %v377, %v374
    %426 = vmatpush.bf16.msra.mxu0 %v399
    %427 = vmatpush.bf16.msra.mxu0 %v396
    %428 = vmatpush.bf16.msra.mxu0 %v393
    %429 = vmatpush.bf16.msra.mxu0 %v390
    %430 = vmatpush.bf16.msra.mxu0 %v387
    %431 = vmatpush.bf16.msra.mxu0 %v384
    %432 = vmatpush.bf16.msra.mxu0 %v381
    %433 = vmatpush.bf16.msra.mxu0 %v378
    %434 = vmatmul.bf16.gmra.mxu0 %v65
    %v435 = vpop.f32.mrf.mxu0
    %v436 = vadd.f32 %v269, %v435
    %v437 = vpop.f32.mrf.mxu0
    %438 = vdwg.mxu0
    %439 = vmatpush.bf16.msra.mxu0 %v400
    %440 = vmatpush.bf16.msra.mxu0 %v397
    %441 = vmatpush.bf16.msra.mxu0 %v394
    %442 = vmatpush.bf16.msra.mxu0 %v391
    %443 = vmatpush.bf16.msra.mxu0 %v388
    %444 = vmatpush.bf16.msra.mxu0 %v385
    %445 = vmatpush.bf16.msra.mxu0 %v382
    %446 = vmatpush.bf16.msra.mxu0 %v379
    %447 = vmatmul.bf16.gmra.mxu0 %v65
    %v448 = vpop.f32.mrf.mxu0
    %v449 = vadd.f32 %v282, %v448
    %v450 = vpop.f32.mrf.mxu0
    %451 = vdwg.mxu0
    %452 = vmatpush.bf16.msra.mxu0 %v401
    %453 = vmatpush.bf16.msra.mxu0 %v398
    %454 = vmatpush.bf16.msra.mxu0 %v395
    %455 = vmatpush.bf16.msra.mxu0 %v392
    %456 = vmatpush.bf16.msra.mxu0 %v389
    %457 = vmatpush.bf16.msra.mxu0 %v386
    %458 = vmatpush.bf16.msra.mxu0 %v383
    %459 = vmatpush.bf16.msra.mxu0 %v380
    %460 = vmatmul.bf16.gmra.mxu0 %v65
    %v461 = vpop.f32.mrf.mxu0
    %v462 = vadd.f32 %v295, %v461
    %v463 = vpop.f32.mrf.mxu0
    %464 = vdwg.mxu0
    %v465 = vxor.u32 %v436, 2147483648
    %v466 = vmul.f32 %v465, 1.442695
    %v467 = vpow.pop %v466
    %v468 = vadd.f32 %v467, 1.0
    %v469 = vrcp.pop %v468
    %v470 = vmul.f32 %v468, %v469
    %v471 = vsub.f32 1.0, %v470
    %v472 = vmul.f32 %v469, %v471
    %v473 = vadd.f32 %v469, %v472
    %vm474 = vweird.f32 %v468
    %vm475 = vweird.f32 %v469
    %vm476 = vmor %vm474, %vm475
    %v477 = vsel %vm476, %v469, %v473
    %v478 = vand.u32 2147483647, %v468
    %vm479 = vcmp.eq.f32.partialorder %v478, 8.507059e+37
    %v480 = vand.u32 %v468, 2147483648
    %v481 = vor.u32 1.1754944e-38, %v480
    %v482 = vsel %vm479, %v481, %v477
    %v483 = vmul.f32 1.0, %v482
    %v484 = vmul.f32 %v483, %v449
    %v485 = vtanh.pop %v484
    %v486 = vadd.f32 %v462, -1.0
    %v487 = vxor.u32 %v486, 2147483648
    %v488 = vmul.f32 %v487, 1.442695
    %v489 = vpow.pop %v488
    %v490 = vadd.f32 %v489, 1.0
    %v491 = vrcp.pop %v490
    %v492 = vmul.f32 %v490, %v491
    %v493 = vsub.f32 1.0, %v492
    %v494 = vmul.f32 %v491, %v493
    %v495 = vadd.f32 %v491, %v494
    %vm496 = vweird.f32 %v490
    %vm497 = vweird.f32 %v491
    %vm498 = vmor %vm496, %vm497
    %v499 = vsel %vm498, %v491, %v495
    %v500 = vand.u32 2147483647, %v490
    %vm501 = vcmp.eq.f32.partialorder %v500, 8.507059e+37
    %v502 = vand.u32 %v490, 2147483648
    %v503 = vor.u32 1.1754944e-38, %v502
    %v504 = vsel %vm501, %v503, %v499
    %v505 = vmul.f32 1.0, %v504
    %v506 = vsub.f32 %v485, %v63
    %v507 = vmul.f32 %v505, %v506
    %v508 = vadd.f32 %v63, %v507
    %v509 = vlaneseq
    %v510 = vand.u32 %v509, 127
    %vm511 = vcmp.lt.s32.totalorder %v510, 32
    %v512 = vsel %vm511, 1, 0
    %vm513 = vcmp.eq.s32.totalorder %v512, 1
    %v514 = vsel %vm513, %v508, 0.0
    %515 = vst [vmem:[#allocation8] sm:$0xff] %v514
    // Predicated region
    $region30: #{tpu_custom_call.1} parent=1 // pred_check
      _
    $region31: #{tpu_custom_call.1} parent=1 // pred_check_branch
      %517 = sbr.rel (0) target = $region33
    $region32: #{tpu_custom_call.1} parent=1 // pred_region
      %519 = vsyncadd [#allocation4], 0
      %s521 = sshll.u32 [#allocation8], 4
      %s522 = int_to_ptr.vmem [resolvable:$true] %s521
      %s523 = sshll.u32 %s4, 4
      %s524 = int_to_ptr.hbm [resolvable:$true] %s523
      %526 = dma.vmem_to_hbm [thread:$0]  %s522, 128, %s524, [#allocation4]
    $region33: #{tpu_custom_call.1} parent=1 // pred_fallthru
      _
    // Predicated region
    $region34: #{tpu_custom_call.1} parent=1 // pred_check
      _
    $region35: #{tpu_custom_call.1} parent=1 // pred_check_branch
      %528 = sbr.rel (0) target = $region37
    $region36: #{tpu_custom_call.1} parent=1 // pred_region
      %530 = dma.done [#allocation4], 128
    $region37: #{tpu_custom_call.1} parent=1 // pred_fallthru
      _
    %531 = vsyncpa [#allocation3], 1
    %532 = vsyncpa [#allocation6], 1
    %533 = vsyncpa [#allocation4], 1

</llo_original>
